<compile_context>
chip_gen: v7x
topology: tpu7x:2x2x1
jax: 0.10.0
libtpu: 0.0.40
codegen_flags: <defaults>
</compile_context>

<pallas_src>
import jax
import jax.numpy as jnp
import numpy as np
from jax.experimental import pallas as pl
from jax.experimental.pallas import tpu as pltpu


def _round_up(a, m):
    return (a + m - 1) // m * m


def _cdiv(a, b):
    return (a + b - 1) // b


# ----------------------------------------------------------------------------
# Kernel: one batch tile, transposed layout (batch on the 128-wide lane axis).
# ----------------------------------------------------------------------------
def neural_controller_kernel(xT_ref, w1t_ref, b1_ref, w2t_ref, b2_ref, o_ref):
    """
    xT_ref : (K, TB)          input features x batch tile
    w1t_ref: (16, K)          fc1 weight, torch (out, in) layout
    b1_ref : (16, 1)
    w2t_ref: (out_size, 16)   fc2 weight, torch (out, in) layout
    b2_ref : (out_size, 1)
    o_ref  : (out_size, TB)
    """
    # fc1 on the MXU: (16, K) @ (K, TB) -> (16, TB), f32 accumulation.
    h = jnp.dot(w1t_ref[...].astype(jnp.float32),
                xT_ref[...].astype(jnp.float32),
                preferred_element_type=jnp.float32)
    h = jnp.maximum(h + b1_ref[...], 0.0)                      # bias + ReLU (VPU)

    # fc2 on the MXU: (out, 16) @ (16, TB) -> (out, TB).
    y = jnp.dot(w2t_ref[...], h, preferred_element_type=jnp.float32)
    y = y + b2_ref[...]

    # tanh on the EUP (free slot), scale on the VPU.
    o_ref[...] = (jnp.tanh(y) * 100.0).astype(o_ref.dtype)


# ----------------------------------------------------------------------------
# Tiling: lane-dense batch tiles, >=2 tiles when possible (v7x megacore).
# ----------------------------------------------------------------------------
def _choose_tile(b128, tb_max):
    """b128: batch rounded up to a multiple of 128. Returns (TB, n_tiles)."""
    tb_max = max(128, (int(tb_max) // 128) * 128)          # clamp to mult. of 128
    n_tiles = _cdiv(b128, tb_max)
    if b128 >= 256:
        n_tiles = max(n_tiles, 2)                          # shard across 2 TCs on v7x
    tb = _round_up(_cdiv(b128, n_tiles), 128)
    n_tiles = _cdiv(b128, tb)
    return tb, n_tiles


# ----------------------------------------------------------------------------
# Preferred entry point: (features, batch) layout, no wrapper layout passes.
# ----------------------------------------------------------------------------
def neural_controller_forward_t(xT, w1, b1, w2, b2, *, tb_max=32768,
                                out_dtype=jnp.float32):
    """xT: (input_size, B_pad) with B_pad a multiple of 128 (batch on lanes).
    w1: (input_size, 16), w2: (16, output_size).  Returns (output_size, B_pad).
    """
    K, B_pad = xT.shape
    hidden = w1.shape[1]
    out_size = w2.shape[1]
    if B_pad % 128 != 0:
        raise ValueError("batch (lane) axis must be a multiple of 128")

    TB, n_tiles = _choose_tile(B_pad, tb_max)

    # Tiny weights/biases: constant index_map -> VMEM-resident across the grid.
    w1t = w1.T.astype(jnp.float32)                 # (16, K)
    w2t = w2.T.astype(jnp.float32)                 # (out, 16)
    b1c = b1.reshape(hidden, 1).astype(jnp.float32)
    b2c = b2.reshape(out_size, 1).astype(jnp.float32)

    return pl.pallas_call(
        neural_controller_kernel,
        out_shape=jax.ShapeDtypeStruct((out_size, B_pad), out_dtype),
        grid=(n_tiles,),
        in_specs=[
            # streamed, double-buffered batch tiles (batch on lanes)
            pl.BlockSpec((K, TB), lambda i: (0, i)),
            # weights / biases: full blocks, constant index -> stay in VMEM
            pl.BlockSpec((hidden, K), lambda i: (0, 0)),
            pl.BlockSpec((hidden, 1), lambda i: (0, 0)),
            pl.BlockSpec((out_size, hidden), lambda i: (0, 0)),
            pl.BlockSpec((out_size, 1), lambda i: (0, 0)),
        ],
        out_specs=pl.BlockSpec((out_size, TB), lambda i: (0, i)),
        compiler_params=pltpu.CompilerParams(
            dimension_semantics=("parallel",),
        ),
    )(xT, w1t, b1c, w2t, b2c)


# ----------------------------------------------------------------------------
# Convenience wrapper: natural (B, input_size) layout.
# ----------------------------------------------------------------------------
def neural_controller_forward(x, w1, b1, w2, b2, *, tb_max=32768,
                              out_dtype=jnp.float32, xla_below=0):
    """x: (B, input_size).  Returns (B, output_size).

    Note: the transpose/pad here are plain-XLA layout plumbing; callers that
    can keep the (features, batch) layout should use
    `neural_controller_forward_t` directly to stay at the HBM roofline.
    """
    B, _ = x.shape
    out_size = w2.shape[1]

    if B <= xla_below:
        # Optional small-batch fallback: kernel launch + layout passes dominate.
        h = jnp.maximum(x @ w1 + b1, 0.0)
        return (jnp.tanh(h @ w2 + b2) * 100.0).astype(out_dtype)

    B128 = _round_up(B, 128)
    TB, n_tiles = _choose_tile(B128, tb_max)
    B_pad = TB * n_tiles

    # Single cheap pad (batch only) + transpose -> batch on the lane axis.
    xT = jnp.pad(x, ((0, B_pad - B), (0, 0))).T
    outT = neural_controller_forward_t(xT, w1, b1, w2, b2, tb_max=tb_max,
                                       out_dtype=out_dtype)
    return outT[:, :B].T


# ----------------------------------------------------------------------------
# Parameter init matching `initialize_weights` (xavier_uniform, bias = 0.1).
# ----------------------------------------------------------------------------
def init_params(key, input_size, output_size, hidden=16):
    k1, k2 = jax.random.split(key)

    def xavier_uniform(k, fan_in, fan_out):
        limit = float(np.sqrt(6.0 / (fan_in + fan_out)))
        # stored as (in, out); the kernel wrapper transposes to torch's (out, in)
        return jax.random.uniform(k, (fan_in, fan_out), jnp.float32, -limit, limit)

    w1 = xavier_uniform(k1, input_size, hidden)
    b1 = jnp.full((hidden,), 0.1, dtype=jnp.float32)
    w2 = xavier_uniform(k2, hidden, output_size)
    b2 = jnp.full((output_size,), 0.1, dtype=jnp.float32)
    return w1, b1, w2, b2


def reference_forward(x, w1, b1, w2, b2):
    h = jnp.maximum(x @ w1 + b1, 0.0)
    return jnp.tanh(h @ w2 + b2) * 100.0


if __name__ == "__main__":
    key = jax.random.PRNGKey(0)
    k_params, k_x1, k_x2 = jax.random.split(key, 3)

    input_size = 4      # small state vector
    output_size = 2     # small action vector
    w1, b1, w2, b2 = init_params(k_params, input_size, output_size)

    # --- tiny batch (module-scale demo) -------------------------------------
    x_small = jax.random.normal(k_x1, (8, input_size), dtype=jnp.float32)
    out_small = jax.block_until_ready(
        neural_controller_forward(x_small, w1, b1, w2, b2))
    np.testing.assert_allclose(np.asarray(out_small),
                               np.asarray(reference_forward(x_small, w1, b1, w2, b2)),
                               rtol=1e-5, atol=1e-4)

    # --- small multi-tile batch (exercises padding + >1 grid step) ----------
    x_multi = jax.random.normal(k_x2, (300, input_size), dtype=jnp.float32)
    out_multi = jax.block_until_ready(
        neural_controller_forward(x_multi, w1, b1, w2, b2, tb_max=128))
    np.testing.assert_allclose(np.asarray(out_multi),
                               np.asarray(reference_forward(x_multi, w1, b1, w2, b2)),
                               rtol=1e-5, atol=1e-4)

    print("KERNEL_OK")
</pallas_src>

<mosaic_0001>
module attributes {stable_mosaic.version = 11 : i64} {
  func.func @neural_controller_kernel(%arg0: i32, %arg1: memref<4x128xf32, #tpu.memory_space<vmem>>, %arg2: memref<16x4xf32, #tpu.memory_space<vmem>>, %arg3: memref<16x1xf32, #tpu.memory_space<vmem>>, %arg4: memref<2x16xf32, #tpu.memory_space<vmem>>, %arg5: memref<2x1xf32, #tpu.memory_space<vmem>>, %arg6: memref<2x128xf32, #tpu.memory_space<vmem>>) attributes {dimension_semantics = [#tpu.dimension_semantics<parallel>], iteration_bounds = array<i64: 1>, scalar_prefetch = 0 : i64, scratch_operands = 0 : i64, tpu.core_type = #tpu.core_type<tc>, window_params = [{transform_indices = @transform_0, window_bounds = array<i64: 4, 128>}, {pipeline_mode = #tpu.pipeline_mode<synchronous>, transform_indices = @transform_1, window_bounds = array<i64: 16, 4>}, {pipeline_mode = #tpu.pipeline_mode<synchronous>, transform_indices = @transform_2, window_bounds = array<i64: 16, 1>}, {pipeline_mode = #tpu.pipeline_mode<synchronous>, transform_indices = @transform_3, window_bounds = array<i64: 2, 16>}, {pipeline_mode = #tpu.pipeline_mode<synchronous>, transform_indices = @transform_4, window_bounds = array<i64: 2, 1>}, {transform_indices = @transform_5, window_bounds = array<i64: 2, 128>}]} {
    %c0 = arith.constant 0 : index
    %c0_0 = arith.constant 0 : index
    %0 = vector.load %arg2[%c0, %c0_0] : memref<16x4xf32, #tpu.memory_space<vmem>>, vector<16x4xf32>
    %c0_1 = arith.constant 0 : index
    %c0_2 = arith.constant 0 : index
    %1 = vector.load %arg1[%c0_1, %c0_2] : memref<4x128xf32, #tpu.memory_space<vmem>>, vector<4x128xf32>
    %cst = arith.constant dense<0.000000e+00> : vector<16x128xf32>
    %2 = tpu.matmul %0, %1, %cst {dimension_numbers = #tpu.dot_dimension_numbers<[1], [0], [0], [1], [0, 0, 1, 1], [], []>} : vector<16x4xf32>, vector<4x128xf32>, vector<16x128xf32> -> vector<16x128xf32>
    %c0_3 = arith.constant 0 : index
    %c0_4 = arith.constant 0 : index
    %3 = vector.load %arg3[%c0_3, %c0_4] : memref<16x1xf32, #tpu.memory_space<vmem>>, vector<16x1xf32>
    %4 = vector.broadcast %3 : vector<16x1xf32> to vector<16x128xf32>
    %5 = arith.addf %2, %4 : vector<16x128xf32>
    %cst_5 = arith.constant 0.000000e+00 : f32
    %6 = vector.broadcast %cst_5 : f32 to vector<16x128xf32>
    %7 = arith.maximumf %5, %6 : vector<16x128xf32>
    %c0_6 = arith.constant 0 : index
    %c0_7 = arith.constant 0 : index
    %8 = vector.load %arg4[%c0_6, %c0_7] : memref<2x16xf32, #tpu.memory_space<vmem>>, vector<2x16xf32>
    %cst_8 = arith.constant dense<0.000000e+00> : vector<2x128xf32>
    %9 = tpu.matmul %8, %7, %cst_8 {dimension_numbers = #tpu.dot_dimension_numbers<[1], [0], [0], [1], [0, 0, 1, 1], [], []>} : vector<2x16xf32>, vector<16x128xf32>, vector<2x128xf32> -> vector<2x128xf32>
    %c0_9 = arith.constant 0 : index
    %c0_10 = arith.constant 0 : index
    %10 = vector.load %arg5[%c0_9, %c0_10] : memref<2x1xf32, #tpu.memory_space<vmem>>, vector<2x1xf32>
    %11 = vector.broadcast %10 : vector<2x1xf32> to vector<2x128xf32>
    %12 = arith.addf %9, %11 : vector<2x128xf32>
    %13 = math.tanh %12 : vector<2x128xf32>
    %cst_11 = arith.constant 1.000000e+02 : f32
    %14 = vector.broadcast %cst_11 : f32 to vector<2x128xf32>
    %15 = arith.mulf %13, %14 : vector<2x128xf32>
    %c0_12 = arith.constant 0 : index
    %c0_13 = arith.constant 0 : index
    %16 = vector.load %arg6[%c0_12, %c0_13] : memref<2x128xf32, #tpu.memory_space<vmem>>, vector<2x128xf32>
    tpu.vector_store %arg6[%c0_12, %c0_13], %15 {strides = array<i32>} : memref<2x128xf32, #tpu.memory_space<vmem>>, vector<2x128xf32>,
    return
  }
  func.func @transform_0(%arg0: i32) -> (i32, i32) {
    %c0_i32 = arith.constant 0 : i32
    %c0_i32_0 = arith.constant 0 : i32
    return %c0_i32, %arg0 : i32, i32
  }
  func.func @transform_1(%arg0: i32) -> (i32, i32) {
    %c0_i32 = arith.constant 0 : i32
    %c0_i32_0 = arith.constant 0 : i32
    %c0_i32_1 = arith.constant 0 : i32
    return %c0_i32, %c0_i32_0 : i32, i32
  }
  func.func @transform_2(%arg0: i32) -> (i32, i32) {
    %c0_i32 = arith.constant 0 : i32
    %c0_i32_0 = arith.constant 0 : i32
    %c0_i32_1 = arith.constant 0 : i32
    return %c0_i32, %c0_i32_0 : i32, i32
  }
  func.func @transform_3(%arg0: i32) -> (i32, i32) {
    %c0_i32 = arith.constant 0 : i32
    %c0_i32_0 = arith.constant 0 : i32
    %c0_i32_1 = arith.constant 0 : i32
    return %c0_i32, %c0_i32_0 : i32, i32
  }
  func.func @transform_4(%arg0: i32) -> (i32, i32) {
    %c0_i32 = arith.constant 0 : i32
    %c0_i32_0 = arith.constant 0 : i32
    %c0_i32_1 = arith.constant 0 : i32
    return %c0_i32, %c0_i32_0 : i32, i32
  }
  func.func @transform_5(%arg0: i32) -> (i32, i32) {
    %c0_i32 = arith.constant 0 : i32
    %c0_i32_0 = arith.constant 0 : i32
    return %c0_i32, %arg0 : i32, i32
  }
}

</mosaic_0001>

<llo_original>
// kernel: tpu_custom_call.1
$region0: #{tpu_custom_call.1}
  #allocation0 [shape = 'u32[]', space=smem, size = 0x4, offset = 0x4, fixed_abs, tag = 'smem constant byte address 0x4 - core index']
  #allocation1 [shape = 'u32[144,128]{1,0:T(1,128)}', space=vmem, size = 0x12000, scoped, tag = 'internal scratch']
  %s0 = inlined_call_operand.vmem [shape: f32[4,128], index: 0, kind: input, shape index: {}]
  %s1 = inlined_call_operand.vmem [shape: f32[16,4], index: 1, kind: input, shape index: {}]
  %s2 = inlined_call_operand.vmem [shape: f32[16,1], index: 2, kind: input, shape index: {}]
  %s3 = inlined_call_operand.vmem [shape: f32[2,16], index: 3, kind: input, shape index: {}]
  %s4 = inlined_call_operand.vmem [shape: f32[2,1], index: 4, kind: input, shape index: {}]
  %s5 = inlined_call_operand.hbm [shape: f32[2,128], index: 5, kind: output, shape index: {}]
  %s6 = sld [smem:[#allocation0]]
  $region30: #{tpu_custom_call.1} parent=0
    _
  %s8 = ssub.s32 1, %s6
  %s9 = scalar_select 0, %s8, %s6
  $region1: #{tpu_custom_call.1} parent=0
    #allocation2 [shape = 'u8[1024]{0}', space=vmem, size = 0x400, scoped, tag = 'output window, operand 0, single buffered']
    #allocation3 [shape = 's32[1]{0}', space=sflag, size = 0x4, scoped, tag = 'scoped memory for tpu_custom_call.1']
    %10 = vsyncpa [#allocation3], 0
    // Predicated region
    $region2: #{tpu_custom_call.1} parent=1 // pred_check
      _
    $region3: #{tpu_custom_call.1} parent=1 // pred_check_branch
      %12 = sbr.rel (0) target = $region5
    $region4: #{tpu_custom_call.1} parent=1 // pred_region
      _
    $region5: #{tpu_custom_call.1} parent=1 // pred_fallthru
      _
    // Predicated region
    $region6: #{tpu_custom_call.1} parent=1 // pred_check
      _
    $region7: #{tpu_custom_call.1} parent=1 // pred_check_branch
      %14 = sbr.rel (0) target = $region9
    $region8: #{tpu_custom_call.1} parent=1 // pred_region
      _
    $region9: #{tpu_custom_call.1} parent=1 // pred_fallthru
      _
    // Predicated region
    $region10: #{tpu_custom_call.1} parent=1 // pred_check
      _
    $region11: #{tpu_custom_call.1} parent=1 // pred_check_branch
      %16 = sbr.rel (0) target = $region13
    $region12: #{tpu_custom_call.1} parent=1 // pred_region
      _
    $region13: #{tpu_custom_call.1} parent=1 // pred_fallthru
      _
    // Predicated region
    $region14: #{tpu_custom_call.1} parent=1 // pred_check
      _
    $region15: #{tpu_custom_call.1} parent=1 // pred_check_branch
      %18 = sbr.rel (0) target = $region17
    $region16: #{tpu_custom_call.1} parent=1 // pred_region
      _
    $region17: #{tpu_custom_call.1} parent=1 // pred_fallthru
      _
    // Predicated region
    $region18: #{tpu_custom_call.1} parent=1 // pred_check
      _
    $region19: #{tpu_custom_call.1} parent=1 // pred_check_branch
      %20 = sbr.rel (0) target = $region21
    $region20: #{tpu_custom_call.1} parent=1 // pred_region
      _
    $region21: #{tpu_custom_call.1} parent=1 // pred_fallthru
      _
    %v21 = vld [vmem:[%s1] sm:$0xff]
    %v22 = vld [vmem:[%s1 + $0x8] sm:$0xff]
    %v23 = vld [vmem:[%s0] sm:$0xf]
    %v24 = vld [vmem:[%s2] sm:$0xff]
    %v25 = vld [vmem:[%s2 + $0x8] sm:$0xff]
    %27 = vset.pattern.permute.xlu0 0
    %28 = vperm.xlu0 %27, %v24
    %v29 = vpop.permute.xlu0 %28
    %32 = vset.pattern.permute.xlu0 0
    %33 = vperm.xlu0 %32, %v25
    %v34 = vpop.permute.xlu0 %33
    %vm36 = vcmask 31744
    %v38 = vsel %vm36, %v21, 0
    %v41 = vsel %vm36, %v22, 0
    %vm43 = vcmask 1043456
    %v45 = vsel %vm43, %v23, 0
    %47 = vmatprep.subr.mxu0 0.0
    %48 = vmatpush1.msra.mxu0 %v45
    %49 = vmatprep.subr.mxu0 0.0
    %50 = vmatpush1.msra.mxu0 0.0
    %51 = vmatprep.subr.mxu0 0.0
    %52 = vmatpush1.msra.mxu0 0.0
    %53 = vmatprep.subr.mxu0 0.0
    %54 = vmatpush1.msra.mxu0 0.0
    %55 = vmatprep.subr.mxu0 0.0
    %56 = vmatpush1.msra.mxu0 0.0
    %57 = vmatprep.subr.mxu0 0.0
    %58 = vmatpush1.msra.mxu0 0.0
    %59 = vmatprep.subr.mxu0 0.0
    %60 = vmatpush1.msra.mxu0 0.0
    %61 = vmatprep.subr.mxu0 0.0
    %62 = vmatpush1.msra.mxu0 0.0
    %63 = vmatprep.subr.mxu0 0.0
    %64 = vmatpush1.msra.mxu0 0.0
    %65 = vmatprep.subr.mxu0 0.0
    %66 = vmatpush1.msra.mxu0 0.0
    %67 = vmatprep.subr.mxu0 0.0
    %68 = vmatpush1.msra.mxu0 0.0
    %69 = vmatprep.subr.mxu0 0.0
    %70 = vmatpush1.msra.mxu0 0.0
    %71 = vmatprep.subr.mxu0 0.0
    %72 = vmatpush1.msra.mxu0 0.0
    %73 = vmatprep.subr.mxu0 0.0
    %74 = vmatpush1.msra.mxu0 0.0
    %75 = vmatprep.subr.mxu0 0.0
    %76 = vmatpush1.msra.mxu0 0.0
    %77 = vmatprep.subr.mxu0 0.0
    %78 = vmatpush1.msra.mxu0 0.0
    %79 = vmatprep.subr.mxu0 0.0
    %80 = vmatpush1.msra.mxu0 0.0
    %81 = vmatprep.subr.mxu0 0.0
    %82 = vmatpush1.msra.mxu0 0.0
    %83 = vmatprep.subr.mxu0 0.0
    %84 = vmatpush1.msra.mxu0 0.0
    %85 = vmatprep.subr.mxu0 0.0
    %86 = vmatpush1.msra.mxu0 0.0
    %87 = vmatprep.subr.mxu0 0.0
    %88 = vmatpush1.msra.mxu0 0.0
    %89 = vmatprep.subr.mxu0 0.0
    %90 = vmatpush1.msra.mxu0 0.0
    %91 = vmatprep.subr.mxu0 0.0
    %92 = vmatpush1.msra.mxu0 0.0
    %93 = vmatprep.subr.mxu0 0.0
    %94 = vmatpush1.msra.mxu0 0.0
    %95 = vmatprep.subr.mxu0 0.0
    %96 = vmatpush1.msra.mxu0 0.0
    %97 = vmatprep.subr.mxu0 0.0
    %98 = vmatpush1.msra.mxu0 0.0
    %99 = vmatprep.subr.mxu0 0.0
    %100 = vmatpush1.msra.mxu0 0.0
    %101 = vmatprep.subr.mxu0 0.0
    %102 = vmatpush1.msra.mxu0 0.0
    %103 = vmatprep.subr.mxu0 0.0
    %104 = vmatpush1.msra.mxu0 0.0
    %105 = vmatprep.subr.mxu0 0.0
    %106 = vmatpush1.msra.mxu0 0.0
    %107 = vmatprep.subr.mxu0 0.0
    %108 = vmatpush1.msra.mxu0 0.0
    %109 = vmatprep.subr.mxu0 0.0
    %110 = vmatpush1.msra.mxu0 0.0
    %111 = vmatprep.mubr.f32.mxu0 0.0
    %112 = vmatmul.mubr.f32.gmra.mrb[0].mxu0 %v38
    %v113 = vpop.f32.mrb[0].mxu0
    %v114 = vadd.f32 %v29, %v113
    %v115 = vpop.f32.mrb[0].mxu0
    %116 = vmatprep.mubr.f32.mxu0 0.0
    %117 = vmatmul.mubr.f32.gmra.mrb[0].mxu0 %v41
    %v118 = vpop.f32.mrb[0].mxu0
    %v119 = vadd.f32 %v34, %v118
    %v120 = vpop.f32.mrb[0].mxu0
    %121 = vdwg.mxu0
    %v122 = vmax.f32 %v114, 0.0
    %v123 = vmax.f32 %v119, 0.0
    %v124 = vld [vmem:[%s3] sm:$0x3]
    %v125 = vld [vmem:[%s4] sm:$0x3]
    %127 = vset.pattern.permute.xlu0 0
    %128 = vperm.xlu0 %127, %v125
    %v129 = vpop.permute.xlu0 %128
    %vm131 = vcmask 130048
    %v133 = vsel %vm131, %v124, 0
    %135 = vmatprep.subr.mxu0 0.0
    %136 = vmatpush1.msra.mxu0 %v122
    %137 = vmatprep.subr.mxu0 0.0
    %138 = vmatpush1.msra.mxu0 %v123
    %139 = vmatprep.subr.mxu0 0.0
    %140 = vmatpush1.msra.mxu0 0.0
    %141 = vmatprep.subr.mxu0 0.0
    %142 = vmatpush1.msra.mxu0 0.0
    %143 = vmatprep.subr.mxu0 0.0
    %144 = vmatpush1.msra.mxu0 0.0
    %145 = vmatprep.subr.mxu0 0.0
    %146 = vmatpush1.msra.mxu0 0.0
    %147 = vmatprep.subr.mxu0 0.0
    %148 = vmatpush1.msra.mxu0 0.0
    %149 = vmatprep.subr.mxu0 0.0
    %150 = vmatpush1.msra.mxu0 0.0
    %151 = vmatprep.subr.mxu0 0.0
    %152 = vmatpush1.msra.mxu0 0.0
    %153 = vmatprep.subr.mxu0 0.0
    %154 = vmatpush1.msra.mxu0 0.0
    %155 = vmatprep.subr.mxu0 0.0
    %156 = vmatpush1.msra.mxu0 0.0
    %157 = vmatprep.subr.mxu0 0.0
    %158 = vmatpush1.msra.mxu0 0.0
    %159 = vmatprep.subr.mxu0 0.0
    %160 = vmatpush1.msra.mxu0 0.0
    %161 = vmatprep.subr.mxu0 0.0
    %162 = vmatpush1.msra.mxu0 0.0
    %163 = vmatprep.subr.mxu0 0.0
    %164 = vmatpush1.msra.mxu0 0.0
    %165 = vmatprep.subr.mxu0 0.0
    %166 = vmatpush1.msra.mxu0 0.0
    %167 = vmatprep.subr.mxu0 0.0
    %168 = vmatpush1.msra.mxu0 0.0
    %169 = vmatprep.subr.mxu0 0.0
    %170 = vmatpush1.msra.mxu0 0.0
    %171 = vmatprep.subr.mxu0 0.0
    %172 = vmatpush1.msra.mxu0 0.0
    %173 = vmatprep.subr.mxu0 0.0
    %174 = vmatpush1.msra.mxu0 0.0
    %175 = vmatprep.subr.mxu0 0.0
    %176 = vmatpush1.msra.mxu0 0.0
    %177 = vmatprep.subr.mxu0 0.0
    %178 = vmatpush1.msra.mxu0 0.0
    %179 = vmatprep.subr.mxu0 0.0
    %180 = vmatpush1.msra.mxu0 0.0
    %181 = vmatprep.subr.mxu0 0.0
    %182 = vmatpush1.msra.mxu0 0.0
    %183 = vmatprep.subr.mxu0 0.0
    %184 = vmatpush1.msra.mxu0 0.0
    %185 = vmatprep.subr.mxu0 0.0
    %186 = vmatpush1.msra.mxu0 0.0
    %187 = vmatprep.subr.mxu0 0.0
    %188 = vmatpush1.msra.mxu0 0.0
    %189 = vmatprep.subr.mxu0 0.0
    %190 = vmatpush1.msra.mxu0 0.0
    %191 = vmatprep.subr.mxu0 0.0
    %192 = vmatpush1.msra.mxu0 0.0
    %193 = vmatprep.subr.mxu0 0.0
    %194 = vmatpush1.msra.mxu0 0.0
    %195 = vmatprep.subr.mxu0 0.0
    %196 = vmatpush1.msra.mxu0 0.0
    %197 = vmatprep.subr.mxu0 0.0
    %198 = vmatpush1.msra.mxu0 0.0
    %199 = vmatprep.mubr.f32.mxu0 0.0
    %200 = vmatmul.mubr.f32.gmra.mrb[0].mxu0 %v133
    %v201 = vpop.f32.mrb[0].mxu0
    %v202 = vadd.f32 %v129, %v201
    %v203 = vpop.f32.mrb[0].mxu0
    %204 = vdwg.mxu0
    %v205 = vtanh.pop %v202
    %v206 = vmul.f32 %v205, 100.0
    %207 = vst [vmem:[#allocation2] sm:$0x3] %v206
    // Predicated region
    $region22: #{tpu_custom_call.1} parent=1 // pred_check
      _
    $region23: #{tpu_custom_call.1} parent=1 // pred_check_branch
      %209 = sbr.rel (0) target = $region25
    $region24: #{tpu_custom_call.1} parent=1 // pred_region
      %s211 = ssub.s32 32, 32
      %212 = vsyncadd [#allocation3], %s211
      %s214 = sshll.u32 [#allocation2], 4
      %s215 = int_to_ptr.vmem [resolvable:$true] %s214
      %217 = dma.vmem_to_hbm [thread:$0]  %s215, 32, %s5, [#allocation3]
    $region25: #{tpu_custom_call.1} parent=1 // pred_fallthru
      _
    // Predicated region
    $region26: #{tpu_custom_call.1} parent=1 // pred_check
      _
    $region27: #{tpu_custom_call.1} parent=1 // pred_check_branch
      %219 = sbr.rel (0) target = $region29
    $region28: #{tpu_custom_call.1} parent=1 // pred_region
      %220 = dma.done [#allocation3], 32
    $region29: #{tpu_custom_call.1} parent=1 // pred_fallthru
      _
    %221 = vsyncpa [#allocation3], 1

</llo_original>
